<compile_context>
chip_gen: v5e
topology: v5e:2x2
jax: 0.10.0
libtpu: 0.0.40
codegen_flags: <defaults>
</compile_context>

<pallas_src>
import numpy as np
import jax
import jax.numpy as jnp
from jax.experimental import pallas as pl
from jax.experimental.pallas import tpu as pltpu

# MATPOWER-style bus column indices (idx_bus)
BUS_TYPE = 1
PD = 2


def _round_up(x, m):
    return ((x + m - 1) // m) * m


def dcpf_kernel(pg_ref, theta0_ref, m_ref, out_ref):
    """out = theta0_aug + Pg @ M_aug  (one MXU pass per (batch, NB) tile).

    Lanes [0, nbus) of `out` hold theta; lane `nbus` holds Pg_slack.
    """
    pg = pg_ref[...].astype(m_ref.dtype)                       # (TB, NGp)
    acc = jnp.dot(pg, m_ref[...], preferred_element_type=jnp.float32)
    # theta0_ref is (1, TN): sublane-broadcast over the batch tile.
    out_ref[...] = (theta0_ref[...] + acc).astype(out_ref.dtype)


def make_dcpf(B, bus, *, param_dtype=jnp.float32, tb=256, tn=1024):
    """Fold all constants (float64) and return (forward, forward_batched)."""
    B64 = np.asarray(B, dtype=np.float64)
    bus64 = np.asarray(bus, dtype=np.float64)
    nbus = B64.shape[0]

    bus_type = bus64[:, BUS_TYPE]
    non_slack = np.where(bus_type != 3)[0]
    slack_idx = int(np.where(bus_type == 3)[0][0])
    gen_buses = np.where(bus_type != 1)[0]
    ng = len(gen_buses)

    # The module's Pg_postflow assembly implicitly assumes the slack
    # generator is Pg[0]; assert it so the fold matches torch semantics.
    assert int(gen_buses[0]) == slack_idx, \
        "slack generator must be the first entry of Pg (matches DCPFLayer)"

    pd = bus64[:, PD]
    B_red = B64[np.ix_(non_slack, non_slack)]
    B_red_inv = np.linalg.inv(B_red)                   # one-time f64 inverse

    # theta0: theta for Pg == 0.
    theta0 = np.zeros(nbus, dtype=np.float64)
    theta0[non_slack] = B_red_inv @ (-pd[non_slack])

    # M[g, :]: d(theta)/d(Pg[g]), scattered back to the full bus dimension.
    pos_in_nonslack = {int(b): i for i, b in enumerate(non_slack)}
    M = np.zeros((ng, nbus), dtype=np.float64)
    for g, b in enumerate(gen_buses):
        b = int(b)
        if b != slack_idx:
            M[g, non_slack] = B_red_inv[:, pos_in_nonslack[b]]

    slack_row = B64[slack_idx, :]
    v = M @ slack_row                                  # d(Pg_slack)/d(Pg)
    c0 = float(slack_row @ theta0 + pd[slack_idx])

    # Augmented fold: column `nbus` carries Pg_slack -> single matmul.
    ncol = nbus + 1
    tn_eff = min(int(tn), _round_up(ncol, 128))        # lane-dense column tile
    nb_pad = _round_up(ncol, tn_eff)
    ng_pad = _round_up(ng, 128)

    M_aug = np.zeros((ng_pad, nb_pad), dtype=np.float64)
    M_aug[:ng, :nbus] = M
    M_aug[:ng, nbus] = v
    theta0_aug = np.zeros((1, nb_pad), dtype=np.float64)
    theta0_aug[0, :nbus] = theta0
    theta0_aug[0, nbus] = c0

    M_j = jnp.asarray(M_aug, dtype=param_dtype)        # bf16 halves HBM bytes
    theta0_j = jnp.asarray(theta0_aug, dtype=jnp.float32)
    m_item = jnp.dtype(param_dtype).itemsize

    def _forward_batched(Pg):
        """Pg: (batch, NG) -> (theta (batch, nbus), Pg_postflow (batch, NG))."""
        b = Pg.shape[0]
        tb_eff = min(int(tb), _round_up(b, 8))         # sublane-aligned tile
        b_pad = _round_up(b, tb_eff)
        grid = (b_pad // tb_eff, nb_pad // tn_eff)

        # Double-buffered per-step VMEM footprint (explicit limit; keeps
        # v5e's 16 MiB default / v7x's 64 MiB physical budget safe).
        step_bytes = 2 * (tb_eff * ng_pad * 4 + ng_pad * tn_eff * m_item
                          + tn_eff * 4 + tb_eff * tn_eff * 4)
        vmem_limit = int(max(16 * 2**20, min(3 * step_bytes, 48 * 2**20)))

        cost = pl.CostEstimate(
            flops=2 * b_pad * ng_pad * nb_pad,
            transcendentals=0,
            bytes_accessed=(ng_pad * nb_pad * m_item
                            + 4 * (b_pad * ng_pad + nb_pad + b_pad * nb_pad)))

        call = pl.pallas_call(
            dcpf_kernel,
            out_shape=jax.ShapeDtypeStruct((b_pad, nb_pad), jnp.float32),
            grid=grid,
            in_specs=[pl.BlockSpec((tb_eff, ng_pad), lambda i, j: (i, 0)),
                      pl.BlockSpec((1, tn_eff), lambda i, j: (0, j)),
                      pl.BlockSpec((ng_pad, tn_eff), lambda i, j: (0, j))],
            out_specs=pl.BlockSpec((tb_eff, tn_eff), lambda i, j: (i, j)),
            compiler_params=pltpu.CompilerParams(
                dimension_semantics=("parallel", "parallel"),
                vmem_limit_bytes=vmem_limit),
            cost_estimate=cost,
        )

        pg_f32 = Pg.astype(jnp.float32)
        pg_pad = jnp.pad(pg_f32, ((0, b_pad - b), (0, ng_pad - ng)))
        out = call(pg_pad, theta0_j, M_j)

        theta = out[:b, :nbus]
        pg_slack = out[:b, nbus:nbus + 1]
        pg_post = jnp.concatenate([pg_slack, pg_f32[:, 1:]], axis=-1)
        return theta, pg_post

    forward_batched = jax.jit(_forward_batched)

    @jax.jit
    def forward(Pg):
        """Module semantics: Pg (NG,) -> (theta (nbus,), Pg_postflow (NG,))."""
        theta, pg_post = forward_batched(Pg[None, :])
        return theta[0], pg_post[0]

    return forward, forward_batched


def reference_forward(Pg, B, bus):
    """Plain-numpy mirror of the PyTorch module (for verification)."""
    B = np.asarray(B, np.float64)
    bus = np.asarray(bus, np.float64)
    Pg = np.asarray(Pg, np.float64)
    bus_type = bus[:, BUS_TYPE]
    non_slack = np.where(bus_type != 3)[0]
    slack = int(np.where(bus_type == 3)[0][0])
    gen_idx = np.where(bus_type != 1)[0]

    Pnet = -bus[:, PD].copy()
    Pnet[gen_idx] += Pg
    B_red = B[np.ix_(non_slack, non_slack)]
    theta = np.zeros(bus.shape[0])
    theta[non_slack] = np.linalg.inv(B_red) @ Pnet[non_slack]
    Pnet[slack] = B[slack, :] @ theta
    Pg_slack = Pnet[slack] + bus[slack, PD]
    Pg_post = np.concatenate([[Pg_slack], Pg[1:]])
    return theta, Pg_post


if __name__ == "__main__":
    # --- deterministic synthetic 8-bus system -------------------------------
    nbus = 8
    # bus matrix: col 1 = BUS_TYPE (3 = slack, 2 = PV, 1 = PQ), col 2 = PD
    bus = np.zeros((nbus, 13), dtype=np.float32)
    bus[:, 0] = np.arange(1, nbus + 1)                       # bus numbers
    bus[:, BUS_TYPE] = np.array([3, 2, 2, 1, 1, 1, 1, 1], np.float32)
    bus[:, PD] = np.array([0.10, 0.20, 0.15, 0.50, 0.40,
                           0.30, 0.60, 0.25], np.float32)

    # DC susceptance matrix B from a ring topology 0-1-...-7-0.
    branches = [(i, (i + 1) % nbus, 2.0 + 0.5 * i) for i in range(nbus)]
    B = np.zeros((nbus, nbus), dtype=np.float32)
    for f, t, b in branches:
        B[f, f] += b
        B[t, t] += b
        B[f, t] -= b
        B[t, f] -= b

    ng = int(np.sum(bus[:, BUS_TYPE] != 1))                  # 3 generators
    key = jax.random.PRNGKey(0)
    k1, k2 = jax.random.split(key)
    Pg_single = jax.random.uniform(k1, (ng,), jnp.float32, 0.1, 1.0)
    batch = 4
    Pg_batch = jax.random.uniform(k2, (batch, ng), jnp.float32, 0.1, 1.0)

    # --- f32 parameters: exact-path check ------------------------------------
    fwd, fwd_batched = make_dcpf(B, bus)

    theta, pg_post = fwd(Pg_single)
    theta_b, pg_post_b = fwd_batched(Pg_batch)
    jax.block_until_ready((theta, pg_post, theta_b, pg_post_b))

    t_ref, p_ref = reference_forward(np.asarray(Pg_single), B, bus)
    np.testing.assert_allclose(np.asarray(theta), t_ref, rtol=1e-4, atol=1e-5)
    np.testing.assert_allclose(np.asarray(pg_post), p_ref, rtol=1e-4, atol=1e-5)
    for i in range(batch):
        t_ref, p_ref = reference_forward(np.asarray(Pg_batch[i]), B, bus)
        np.testing.assert_allclose(np.asarray(theta_b[i]), t_ref,
                                   rtol=1e-4, atol=1e-5)
        np.testing.assert_allclose(np.asarray(pg_post_b[i]), p_ref,
                                   rtol=1e-4, atol=1e-5)

    # --- bf16-parameter variant (halves HBM bytes for M; looser tolerance) ---
    _, fwd_bf16 = make_dcpf(B, bus, param_dtype=jnp.bfloat16)
    theta_h, pg_post_h = fwd_bf16(Pg_batch)
    jax.block_until_ready((theta_h, pg_post_h))
    for i in range(batch):
        t_ref, p_ref = reference_forward(np.asarray(Pg_batch[i]), B, bus)
        np.testing.assert_allclose(np.asarray(theta_h[i]), t_ref,
                                   rtol=5e-2, atol=5e-2)
        np.testing.assert_allclose(np.asarray(pg_post_h[i]), p_ref,
                                   rtol=5e-2, atol=5e-2)

    print("KERNEL_OK")
</pallas_src>

<mosaic_0001>
module attributes {stable_mosaic.version = 11 : i64} {
  func.func @dcpf_kernel(%arg0: i32, %arg1: i32, %arg2: memref<8x128xf32, #tpu.memory_space<vmem>>, %arg3: memref<1x128xf32, #tpu.memory_space<vmem>>, %arg4: memref<128x128xf32, #tpu.memory_space<vmem>>, %arg5: memref<8x128xf32, #tpu.memory_space<vmem>>) attributes {dimension_semantics = [#tpu.dimension_semantics<parallel>, #tpu.dimension_semantics<parallel>], iteration_bounds = array<i64: 1, 1>, scalar_prefetch = 0 : i64, scratch_operands = 0 : i64, tpu.core_type = #tpu.core_type<tc>, window_params = [{transform_indices = @transform_0, window_bounds = array<i64: 8, 128>}, {transform_indices = @transform_1, window_bounds = array<i64: 1, 128>}, {transform_indices = @transform_2, window_bounds = array<i64: 128, 128>}, {transform_indices = @transform_3, window_bounds = array<i64: 8, 128>}]} {
    %c0 = arith.constant 0 : index
    %c0_0 = arith.constant 0 : index
    %0 = vector.load %arg2[%c0, %c0_0] : memref<8x128xf32, #tpu.memory_space<vmem>>, vector<8x128xf32>
    %c0_1 = arith.constant 0 : index
    %c0_2 = arith.constant 0 : index
    %1 = vector.load %arg4[%c0_1, %c0_2] : memref<128x128xf32, #tpu.memory_space<vmem>>, vector<128x128xf32>
    %cst = arith.constant dense<0.000000e+00> : vector<8x128xf32>
    %2 = tpu.matmul %0, %1, %cst {dimension_numbers = #tpu.dot_dimension_numbers<[1], [0], [0], [1], [0, 0, 1, 1], [], []>} : vector<8x128xf32>, vector<128x128xf32>, vector<8x128xf32> -> vector<8x128xf32>
    %c0_3 = arith.constant 0 : index
    %c0_4 = arith.constant 0 : index
    %3 = vector.load %arg3[%c0_3, %c0_4] : memref<1x128xf32, #tpu.memory_space<vmem>>, vector<1x128xf32>
    %4 = vector.broadcast %3 : vector<1x128xf32> to vector<8x128xf32>
    %5 = arith.addf %4, %2 : vector<8x128xf32>
    %c0_5 = arith.constant 0 : index
    %c0_6 = arith.constant 0 : index
    %6 = vector.load %arg5[%c0_5, %c0_6] : memref<8x128xf32, #tpu.memory_space<vmem>>, vector<8x128xf32>
    tpu.vector_store %arg5[%c0_5, %c0_6], %5 {strides = array<i32>} : memref<8x128xf32, #tpu.memory_space<vmem>>, vector<8x128xf32>,
    return
  }
  func.func @transform_0(%arg0: i32, %arg1: i32) -> (i32, i32) {
    %c0_i32 = arith.constant 0 : i32
    %c0_i32_0 = arith.constant 0 : i32
    return %arg0, %c0_i32 : i32, i32
  }
  func.func @transform_1(%arg0: i32, %arg1: i32) -> (i32, i32) {
    %c0_i32 = arith.constant 0 : i32
    %c0_i32_0 = arith.constant 0 : i32
    return %c0_i32, %arg1 : i32, i32
  }
  func.func @transform_2(%arg0: i32, %arg1: i32) -> (i32, i32) {
    %c0_i32 = arith.constant 0 : i32
    %c0_i32_0 = arith.constant 0 : i32
    return %c0_i32, %arg1 : i32, i32
  }
  func.func @transform_3(%arg0: i32, %arg1: i32) -> (i32, i32) {
    %c0_i32 = arith.constant 0 : i32
    return %arg0, %arg1 : i32, i32
  }
}

</mosaic_0001>

<llo_original>
// kernel: _forward_batched.1
$region0: #{_forward_batched.1}
  #allocation0 [shape = 'u32[]', space=smem, size = 0x4, offset = 0x4, fixed_abs, tag = 'smem constant byte address 0x4 - core index']
  #allocation1 [shape = 'u32[72,128]{1,0:T(1,128)}', space=vmem, size = 0x9000, scoped, tag = 'internal scratch']
  %s0 = inlined_call_operand.vmem [shape: f32[8,128], index: 0, kind: input, shape index: {}]
  %s1 = inlined_call_operand.vmem [shape: f32[1,128], index: 1, kind: input, shape index: {}]
  %s2 = inlined_call_operand.hbm [shape: f32[128,128], index: 2, kind: input, shape index: {}]
  %s3 = inlined_call_operand.vmem [shape: f32[8,128], index: 3, kind: output, shape index: {}]
  %s4 = sld [smem:[#allocation0]]
  $region26: #{_forward_batched.1} parent=0
    _
  %s6 = ssub.s32 1, %s4
  %s7 = scalar_select 0, %s6, %s4
  $region1: #{_forward_batched.1} parent=0
    #allocation2 [shape = 'u8[65536]{0}', space=vmem, size = 0x10000, scoped, tag = 'input window, operand 2, single buffered']
    #allocation3 [shape = 's32[1]{0}', space=sflag, size = 0x4, scoped, tag = 'scoped memory for _forward_batched.1']
    %8 = vsyncpa [#allocation3], 0
    // Predicated region
    $region2: #{_forward_batched.1} parent=1 // pred_check
      _
    $region3: #{_forward_batched.1} parent=1 // pred_check_branch
      %10 = sbr.rel (0) target = $region5
    $region4: #{_forward_batched.1} parent=1 // pred_region
      _
    $region5: #{_forward_batched.1} parent=1 // pred_fallthru
      _
    // Predicated region
    $region6: #{_forward_batched.1} parent=1 // pred_check
      _
    $region7: #{_forward_batched.1} parent=1 // pred_check_branch
      %12 = sbr.rel (0) target = $region9
    $region8: #{_forward_batched.1} parent=1 // pred_region
      _
    $region9: #{_forward_batched.1} parent=1 // pred_fallthru
      _
    // Predicated region
    $region10: #{_forward_batched.1} parent=1 // pred_check
      _
    $region11: #{_forward_batched.1} parent=1 // pred_check_branch
      %14 = sbr.rel (0) target = $region13
    $region12: #{_forward_batched.1} parent=1 // pred_region
      %16 = vsyncadd [#allocation3], 0
      %s17 = sshll.u32 %s2, 4
      %s18 = int_to_ptr.hbm [resolvable:$true] %s17
      %s19 = sshll.u32 [#allocation2], 4
      %s20 = int_to_ptr.vmem [resolvable:$true] %s19
      %25 = dma.hbm_to_vmem [thread:$0]  %s18, 2048, %s20, [#allocation3], 128, 128, 8
    $region13: #{_forward_batched.1} parent=1 // pred_fallthru
      _
    // Predicated region
    $region14: #{_forward_batched.1} parent=1 // pred_check
      _
    $region15: #{_forward_batched.1} parent=1 // pred_check_branch
      %27 = sbr.rel (0) target = $region17
    $region16: #{_forward_batched.1} parent=1 // pred_region
      %29 = dma.done [#allocation3], 2048
    $region17: #{_forward_batched.1} parent=1 // pred_fallthru
      _
    %v30 = vld [vmem:[%s0] sm:$0xff]
    %v31 = vld [vmem:[#allocation2] sm:$0xff]
    %v32 = vld [vmem:[#allocation2 + $0x8] sm:$0xff]
    %v33 = vld [vmem:[#allocation2 + $0x10] sm:$0xff]
    %v34 = vld [vmem:[#allocation2 + $0x18] sm:$0xff]
    %v35 = vld [vmem:[#allocation2 + $0x20] sm:$0xff]
    %v36 = vld [vmem:[#allocation2 + $0x28] sm:$0xff]
    %v37 = vld [vmem:[#allocation2 + $0x30] sm:$0xff]
    %v38 = vld [vmem:[#allocation2 + $0x38] sm:$0xff]
    %v39 = vld [vmem:[#allocation2 + $0x40] sm:$0xff]
    %v40 = vld [vmem:[#allocation2 + $0x48] sm:$0xff]
    %v41 = vld [vmem:[#allocation2 + $0x50] sm:$0xff]
    %v42 = vld [vmem:[#allocation2 + $0x58] sm:$0xff]
    %v43 = vld [vmem:[#allocation2 + $0x60] sm:$0xff]
    %v44 = vld [vmem:[#allocation2 + $0x68] sm:$0xff]
    %v45 = vld [vmem:[#allocation2 + $0x70] sm:$0xff]
    %v46 = vld [vmem:[#allocation2 + $0x78] sm:$0xff]
    %47 = vmatpush.msra.mxu0 %v46
    %48 = vmatpush.msra.mxu0 %v45
    %49 = vmatpush.msra.mxu0 %v44
    %50 = vmatpush.msra.mxu0 %v43
    %51 = vmatpush.msra.mxu0 %v42
    %52 = vmatpush.msra.mxu0 %v41
    %53 = vmatpush.msra.mxu0 %v40
    %54 = vmatpush.msra.mxu0 %v39
    %55 = vmatpush.msra.mxu0 %v38
    %56 = vmatpush.msra.mxu0 %v37
    %57 = vmatpush.msra.mxu0 %v36
    %58 = vmatpush.msra.mxu0 %v35
    %59 = vmatpush.msra.mxu0 %v34
    %60 = vmatpush.msra.mxu0 %v33
    %61 = vmatpush.msra.mxu0 %v32
    %62 = vmatpush.msra.mxu0 %v31
    %63 = vmatmul.f32.gmra.mxu0 %v30
    %v64 = vpop.f32.mrf.mxu0
    %v65 = vadd.f32 0.0, %v64
    %66 = vdwg.mxu0
    %v67 = vld [vmem:[%s1] sm:$0x1]
    %v69 = vperm.slane %v67, 0
    %v71 = vadd.f32 %v69, %v65
    %72 = vst [vmem:[%s3] sm:$0xff] %v71
    // Predicated region
    $region18: #{_forward_batched.1} parent=1 // pred_check
      _
    $region19: #{_forward_batched.1} parent=1 // pred_check_branch
      %74 = sbr.rel (0) target = $region21
    $region20: #{_forward_batched.1} parent=1 // pred_region
      _
    $region21: #{_forward_batched.1} parent=1 // pred_fallthru
      _
    // Predicated region
    $region22: #{_forward_batched.1} parent=1 // pred_check
      _
    $region23: #{_forward_batched.1} parent=1 // pred_check_branch
      %76 = sbr.rel (0) target = $region25
    $region24: #{_forward_batched.1} parent=1 // pred_region
      _
    $region25: #{_forward_batched.1} parent=1 // pred_fallthru
      _
    %77 = vsyncpa [#allocation3], 1

</llo_original>
